<compile_context>
chip_gen: v7x
topology: tpu7x:2x2x1
jax: 0.10.0
libtpu: 0.0.40
codegen_flags: <defaults>
</compile_context>

<pallas_src>
import math

import jax
import jax.numpy as jnp
from jax import lax
from jax.experimental import pallas as pl
from jax.experimental.pallas import tpu as pltpu  # noqa: F401  (whole-array VMEM residency; no TPU-specific params needed at these sizes)


# --------------------------------------------------------------------------
# Pallas kernels
# --------------------------------------------------------------------------

def _pars_fwd_kernel(pars_ref, wp_ref, bp_ref, o_ref):
    # Fused [Wp1 | Wp2] projection: (1, P) @ (P, 2*S*E) + bias.
    # Single lane-dense matmul (2*S*E = 512 lanes); runs once per leak/time.
    o_ref[...] = (
        jnp.dot(pars_ref[...].astype(jnp.bfloat16), wp_ref[...],
                preferred_element_type=jnp.float32)
        + bp_ref[...]
    )


def _attn_block(x, p, wq_ref, wk_ref, wv_ref, wo_ref):
    """Single-head cross-attention + residual on token-major x.

    x: (T, E) f32 tokens (T = S*N); every token attends over the same context.
    p: (S, E) bf16 shared parameter context.
    wq is pre-scaled by 1/sqrt(E) at init (no extra VPU multiply here).
    """
    E = x.shape[-1]
    k = jnp.dot(p, wk_ref[...], preferred_element_type=jnp.float32)       # (S, E)
    v = jnp.dot(p, wv_ref[...], preferred_element_type=jnp.float32)       # (S, E)
    q = jnp.dot(x.astype(jnp.bfloat16), wq_ref[...],
                preferred_element_type=jnp.float32)                       # (T, E)

    # Contract the E axis of q and k directly (no explicit transpose).
    scores = lax.dot_general(q.astype(jnp.bfloat16), k.astype(jnp.bfloat16),
                             (((1,), (1,)), ((), ())),
                             preferred_element_type=jnp.float32)          # (T, S)

    # Softmax in f32; reciprocal on the EUP slot instead of a VALU divide.
    scores = scores - jnp.max(scores, axis=-1, keepdims=True)
    w = jnp.exp(scores)
    w = w * pl.reciprocal(jnp.sum(w, axis=-1, keepdims=True), approx=True)

    attn = jnp.dot(w.astype(jnp.bfloat16), v.astype(jnp.bfloat16),
                   preferred_element_type=jnp.float32)                    # (T, E)
    out = jnp.dot(attn.astype(jnp.bfloat16), wo_ref[...],
                  preferred_element_type=jnp.float32)                     # (T, E)
    return x + out                                                        # residual (f32)


def _state_fwd_kernel(latent_ref, w_in_ref, b_in_ref,
                      p1_ref, wq1_ref, wk1_ref, wv1_ref, wo1_ref,
                      p2_ref, wq2_ref, wk2_ref, wv2_ref, wo2_ref,
                      w_out_ref, b_out_ref, o_ref):
    """Fully fused state_forward: input linear -> 2x cross-attn -> output head."""
    N = latent_ref.shape[0]
    S, _, E = w_in_ref.shape
    D = w_out_ref.shape[2]

    lat = latent_ref[...].astype(jnp.bfloat16)                            # (N, L)

    # Input projection into token-major layout (S*N, E); row s*N + n is token
    # (sample n, position s).  Built by S small matmuls + sublane concat so no
    # in-kernel reshape is required.
    x = jnp.concatenate(
        [jnp.dot(lat, w_in_ref[s], preferred_element_type=jnp.float32) + b_in_ref[s]
         for s in range(S)],
        axis=0)                                                           # (S*N, E) f32

    # Two cross-attention blocks; K/V derive from a single shared (S, E)
    # context (computed once per call, NOT per sample).
    p1 = p1_ref[...].astype(jnp.bfloat16)
    p2 = p2_ref[...].astype(jnp.bfloat16)
    x = _attn_block(x, p1, wq1_ref, wk1_ref, wv1_ref, wo1_ref)
    x = _attn_block(x, p2, wq2_ref, wk2_ref, wv2_ref, wo2_ref)

    # Output head: out[n] = sum_s x[token(n, s)] @ W_out[s] + b_out.
    out = b_out_ref[...]                                                  # (1, D)
    for s in range(S):
        xs = x[s * N:(s + 1) * N, :].astype(jnp.bfloat16)                 # aligned sublane slice
        out = out + jnp.dot(xs, w_out_ref[s], preferred_element_type=jnp.float32)
    o_ref[...] = out                                                      # (N, D), lane-dense D


# --------------------------------------------------------------------------
# Synthetic generator (deterministic parameters, structure implied by module)
# --------------------------------------------------------------------------

class Generator:
    def __init__(self, latent_dim, pars_dim, seq_len, embed_dim, state_dim,
                 key=jax.random.PRNGKey(42)):
        self.latent_dim = latent_dim
        self.pars_dim = pars_dim
        self.seq_len = seq_len
        self.embed_dim = embed_dim
        self.state_dim = state_dim

        S, E, L, D, P = seq_len, embed_dim, latent_dim, state_dim, pars_dim
        ks = jax.random.split(key, 12)
        scale_init = 0.1

        def w(k, shape):
            return scale_init * jax.random.normal(k, shape, dtype=jnp.float32)

        # pars_forward: fused [Wp1 | Wp2] -> one lane-dense (P, 2*S*E) matmul.
        wp1 = w(ks[0], (P, S * E))
        wp2 = w(ks[1], (P, S * E))
        self.Wp_cat = jnp.concatenate([wp1, wp2], axis=1).astype(jnp.bfloat16)
        self.bp_cat = jnp.zeros((1, 2 * S * E), jnp.float32)

        # state_forward weights, pre-arranged so the fused kernel never reshapes.
        w_in = w(ks[2], (L, S * E))
        self.W_in3 = jnp.transpose(w_in.reshape(L, S, E), (1, 0, 2)).astype(jnp.bfloat16)  # (S, L, E)
        self.b_in3 = jnp.zeros((S, 1, E), jnp.float32)

        qk_scale = 1.0 / math.sqrt(E)     # attention scale folded into Wq at init
        self.Wq1 = (w(ks[3], (E, E)) * qk_scale).astype(jnp.bfloat16)
        self.Wk1 = w(ks[4], (E, E)).astype(jnp.bfloat16)
        self.Wv1 = w(ks[5], (E, E)).astype(jnp.bfloat16)
        self.Wo1 = w(ks[6], (E, E)).astype(jnp.bfloat16)
        self.Wq2 = (w(ks[7], (E, E)) * qk_scale).astype(jnp.bfloat16)
        self.Wk2 = w(ks[8], (E, E)).astype(jnp.bfloat16)
        self.Wv2 = w(ks[9], (E, E)).astype(jnp.bfloat16)
        self.Wo2 = w(ks[10], (E, E)).astype(jnp.bfloat16)

        w_out = w(ks[11], (S * E, D))
        self.W_out3 = w_out.reshape(S, E, D).astype(jnp.bfloat16)         # (S, E, D)
        self.b_out = jnp.zeros((1, D), jnp.float32)

    # -- pars_forward: one tiny Pallas call, runs once per leak/time pair ----
    def pars_forward(self, pars):
        S, E = self.seq_len, self.embed_dim
        p_cat = pl.pallas_call(
            _pars_fwd_kernel,
            out_shape=jax.ShapeDtypeStruct((1, 2 * S * E), jnp.float32),
        )(pars, self.Wp_cat, self.bp_cat)
        p12 = p_cat.reshape(2, S, E)          # one-time host-side reshape (2 KB)
        return p12[0][None], p12[1][None]     # (1, S, E) each

    # -- state_forward: the hot path, fully fused into ONE pallas_call -------
    def state_forward(self, latent, pars_attn_1, pars_attn_2):
        N = latent.shape[0]
        S, E, D = self.seq_len, self.embed_dim, self.state_dim
        # The original module tiles identical pars contexts over the batch;
        # a single shared (S, E) copy is mathematically equivalent and avoids
        # N x redundant HBM traffic and K/V matmuls.
        p1 = pars_attn_1.reshape(-1, S, E)[0]
        p2 = pars_attn_2.reshape(-1, S, E)[0]
        return pl.pallas_call(
            _state_fwd_kernel,
            out_shape=jax.ShapeDtypeStruct((N, D), jnp.float32),
        )(latent, self.W_in3, self.b_in3,
          p1, self.Wq1, self.Wk1, self.Wv1, self.Wo1,
          p2, self.Wq2, self.Wk2, self.Wv2, self.Wo2,
          self.W_out3, self.b_out)


# --------------------------------------------------------------------------
# ForwardModel — semantics matching the PyTorch module
# --------------------------------------------------------------------------

class ForwardModel:
    def __init__(self, generator):
        self.generator = generator
        self.latent_dim = generator.latent_dim
        self.pars_init = False
        self.pars_1 = None
        self.pars_2 = None

    def _sample_latent(self, shape, key):
        # torch.randn equivalent (deterministic via explicit key)
        return jax.random.normal(key, shape, dtype=jnp.float32)

    def __call__(self, num_samples, leak_location, time, key):
        latent_samples = self._sample_latent((num_samples, self.latent_dim), key)
        if not self.pars_init:
            pars = jnp.concatenate([leak_location, time], axis=0)   # cat dim=0
            pars = pars[None, :]                                    # unsqueeze(0)
            pars_1, pars_2 = self.generator.pars_forward(pars)
            # Cache UN-tiled contexts (fixes num_samples-change hazard; the
            # tiled copies of the original module are identical rows anyway).
            self.pars_1, self.pars_2 = pars_1, pars_2
            self.pars_init = True
        return self.generator.state_forward(
            latent_samples, self.pars_1, self.pars_2)


# --------------------------------------------------------------------------
if __name__ == "__main__":
    num_samples = 8
    latent_dim = 32
    seq_len = 8
    embed_dim = 32
    state_dim = 128    # lane-dense output head (multiple of 128)
    n_leak = 16        # leak-location one-hot length
    n_time = 8         # time encoding length
    pars_dim = n_leak + n_time

    gen = Generator(latent_dim, pars_dim, seq_len, embed_dim, state_dim)
    model = ForwardModel(gen)

    key = jax.random.PRNGKey(0)
    k_lat, k_time = jax.random.split(key)

    # deterministic example "parameters": one-hot leak location + time features
    leak_location = jnp.zeros((n_leak,), jnp.float32).at[3].set(1.0)
    time = jax.random.normal(k_time, (n_time,), dtype=jnp.float32)

    out = model(num_samples, leak_location, time, k_lat)
    out = jax.block_until_ready(out)

    assert out.shape == (num_samples, state_dim)
    assert out.dtype == jnp.float32
    assert bool(jnp.all(jnp.isfinite(out)))

    # second call with a different num_samples exercises the cached (un-tiled)
    # pars path — runs the same single fused kernel with a new batch size.
    out2 = jax.block_until_ready(model(4, leak_location, time, k_lat))
    assert out2.shape == (4, state_dim)

    print("KERNEL_OK")
</pallas_src>

<mosaic_0001>
module attributes {stable_mosaic.version = 11 : i64} {
  func.func @_pars_fwd_kernel(%arg0: memref<1x24xf32, #tpu.memory_space<vmem>>, %arg1: memref<24x512xbf16, #tpu.memory_space<vmem>>, %arg2: memref<1x512xf32, #tpu.memory_space<vmem>>, %arg3: memref<1x512xf32, #tpu.memory_space<vmem>>) attributes {dimension_semantics = [], scalar_prefetch = 0 : i64, scratch_operands = 0 : i64, tpu.core_type = #tpu.core_type<tc>} {
    %c0 = arith.constant 0 : index
    %c0_0 = arith.constant 0 : index
    %0 = vector.load %arg0[%c0, %c0_0] : memref<1x24xf32, #tpu.memory_space<vmem>>, vector<1x24xf32>
    %1 = arith.truncf %0 : vector<1x24xf32> to vector<1x24xbf16>
    %c0_1 = arith.constant 0 : index
    %c0_2 = arith.constant 0 : index
    %2 = vector.load %arg1[%c0_1, %c0_2] : memref<24x512xbf16, #tpu.memory_space<vmem>>, vector<24x512xbf16>
    %cst = arith.constant dense<0.000000e+00> : vector<1x512xf32>
    %3 = tpu.matmul %1, %2, %cst {dimension_numbers = #tpu.dot_dimension_numbers<[1], [0], [0], [1], [0, 0, 1, 1], [], []>} : vector<1x24xbf16>, vector<24x512xbf16>, vector<1x512xf32> -> vector<1x512xf32>
    %c0_3 = arith.constant 0 : index
    %c0_4 = arith.constant 0 : index
    %4 = vector.load %arg2[%c0_3, %c0_4] : memref<1x512xf32, #tpu.memory_space<vmem>>, vector<1x512xf32>
    %5 = arith.addf %3, %4 : vector<1x512xf32>
    %c0_5 = arith.constant 0 : index
    %c0_6 = arith.constant 0 : index
    %6 = vector.load %arg3[%c0_5, %c0_6] : memref<1x512xf32, #tpu.memory_space<vmem>>, vector<1x512xf32>
    tpu.vector_store %arg3[%c0_5, %c0_6], %5 {strides = array<i32>} : memref<1x512xf32, #tpu.memory_space<vmem>>, vector<1x512xf32>,
    return
  }
}

</mosaic_0001>

<llo_original>
// kernel: tpu_custom_call.1
$region0: #{tpu_custom_call.1}
  #allocation0 [shape = 'u32[]', space=smem, size = 0x4, offset = 0x4, fixed_abs, tag = 'smem constant byte address 0x4 - core index']
  #allocation1 [shape = 'u32[144,128]{1,0:T(1,128)}', space=vmem, size = 0x12000, scoped, tag = 'internal scratch']
  %s0 = inlined_call_operand.hbm [shape: f32[1,24], index: 0, kind: input, shape index: {}]
  %s1 = inlined_call_operand.hbm [shape: bf16[24,512], index: 1, kind: input, shape index: {}]
  %s2 = inlined_call_operand.vmem [shape: f32[1,512], index: 2, kind: input, shape index: {}]
  %s3 = inlined_call_operand.hbm [shape: f32[1,512], index: 3, kind: output, shape index: {}]
  %s4 = sld [smem:[#allocation0]]
  $region30: #{tpu_custom_call.1} parent=0
    _
  %s6 = ssub.s32 1, %s4
  %s7 = scalar_select 0, %s6, %s4
  $region1: #{tpu_custom_call.1} parent=0
    #allocation2 [shape = 'u8[512]{0}', space=vmem, size = 0x400, scoped, tag = 'input window, operand 0, single buffered']
    #allocation3 [shape = 's32[1]{0}', space=sflag, size = 0x4, scoped, tag = 'scoped memory for tpu_custom_call.1']
    #allocation4 [shape = 's32[1]{0}', space=sflag, size = 0x4, scoped, tag = 'scoped memory for tpu_custom_call.1']
    #allocation5 [shape = 'u8[24576]{0}', space=vmem, size = 0x6000, scoped, tag = 'input window, operand 1, single buffered']
    #allocation6 [shape = 's32[1]{0}', space=sflag, size = 0x4, scoped, tag = 'scoped memory for tpu_custom_call.1']
    #allocation7 [shape = 'u8[2048]{0}', space=vmem, size = 0x800, scoped, tag = 'output window, operand 0, single buffered']
    %8 = vsyncpa [#allocation3], 0
    %9 = vsyncpa [#allocation6], 0
    %10 = vsyncpa [#allocation4], 0
    // Predicated region
    $region2: #{tpu_custom_call.1} parent=1 // pred_check
      _
    $region3: #{tpu_custom_call.1} parent=1 // pred_check_branch
      %12 = sbr.rel (0) target = $region5
    $region4: #{tpu_custom_call.1} parent=1 // pred_region
      %s14 = ssub.s32 16, 16
      %15 = vsyncadd [#allocation3], %s14
      %s17 = sshll.u32 [#allocation2], 4
      %s18 = int_to_ptr.vmem [resolvable:$true] %s17
      %20 = dma.hbm_to_vmem [thread:$0]  %s0, 16, %s18, [#allocation3]
    $region5: #{tpu_custom_call.1} parent=1 // pred_fallthru
      _
    // Predicated region
    $region6: #{tpu_custom_call.1} parent=1 // pred_check
      _
    $region7: #{tpu_custom_call.1} parent=1 // pred_check_branch
      %22 = sbr.rel (0) target = $region9
    $region8: #{tpu_custom_call.1} parent=1 // pred_region
      %s24 = ssub.s32 768, 768
      %25 = vsyncadd [#allocation6], %s24
      %s26 = sshll.u32 [#allocation5], 4
      %s27 = int_to_ptr.vmem [resolvable:$true] %s26
      %32 = dma.hbm_to_vmem [thread:$0]  %s1, 768, %s27, [#allocation6], 256, 256, 16
    $region9: #{tpu_custom_call.1} parent=1 // pred_fallthru
      _
    // Predicated region
    $region10: #{tpu_custom_call.1} parent=1 // pred_check
      _
    $region11: #{tpu_custom_call.1} parent=1 // pred_check_branch
      %34 = sbr.rel (0) target = $region13
    $region12: #{tpu_custom_call.1} parent=1 // pred_region
      _
    $region13: #{tpu_custom_call.1} parent=1 // pred_fallthru
      _
    // Predicated region
    $region14: #{tpu_custom_call.1} parent=1 // pred_check
      _
    $region15: #{tpu_custom_call.1} parent=1 // pred_check_branch
      %36 = sbr.rel (0) target = $region17
    $region16: #{tpu_custom_call.1} parent=1 // pred_region
      %37 = dma.done [#allocation3], 16
    $region17: #{tpu_custom_call.1} parent=1 // pred_fallthru
      _
    // Predicated region
    $region18: #{tpu_custom_call.1} parent=1 // pred_check
      _
    $region19: #{tpu_custom_call.1} parent=1 // pred_check_branch
      %39 = sbr.rel (0) target = $region21
    $region20: #{tpu_custom_call.1} parent=1 // pred_region
      %40 = dma.done [#allocation6], 768
    $region21: #{tpu_custom_call.1} parent=1 // pred_fallthru
      _
    %v42 = vld [vmem:[#allocation2] sm:$0x1]
    %v43 = vpack.c.bf16 %v42, %v42
    %v44 = vld [vmem:[#allocation5] sm:$0xff]
    %v45 = vld [vmem:[#allocation5 + $0x8] sm:$0xff]
    %v46 = vld [vmem:[#allocation5 + $0x10] sm:$0xff]
    %v47 = vld [vmem:[#allocation5 + $0x18] sm:$0xff]
    %v48 = vld [vmem:[#allocation5 + $0x20] sm:$0xff]
    %v49 = vld [vmem:[#allocation5 + $0x28] sm:$0xff]
    %v50 = vld [vmem:[%s2] sm:$0xf]
    %v57 = vunpack.c.l.b16 %v44
    %v58 = vunpack.c.h.b16 %v44
    %v59 = vunpack.c.l.b16 %v45
    %v60 = vunpack.c.h.b16 %v45
    %v61 = vunpack.c.l.b16 %v46
    %v62 = vunpack.c.h.b16 %v46
    %v63 = vunpack.c.l.b16 %v47
    %v64 = vunpack.c.h.b16 %v47
    %v65 = vunpack.c.l.b16 %v48
    %v66 = vunpack.c.h.b16 %v48
    %v67 = vunpack.c.l.b16 %v49
    %v68 = vunpack.c.h.b16 %v49
    %v69 = vpack.c.b16 %v61, %v57
    %v70 = vpack.c.b16 %v62, %v58
    %v71 = vpack.c.b16 %v63, %v59
    %v72 = vpack.c.b16 %v64, %v60
    %v73 = vpack.c.b16 %v65, %v65
    %v74 = vpack.c.b16 %v66, %v66
    %v75 = vpack.c.b16 %v67, %v67
    %v76 = vpack.c.b16 %v68, %v68
    %v82 = vlaneseq
    %v83 = vshrl.u32 %v82, 7
    %v84 = vsub.s32 0, %v83
    %v85 = vrot.slane %v50, %v84
    %v86 = vlaneseq
    %v87 = vshrl.u32 %v86, 7
    %v88 = vsub.s32 1, %v87
    %v89 = vrot.slane %v50, %v88
    %v90 = vlaneseq
    %v91 = vshrl.u32 %v90, 7
    %v92 = vsub.s32 2, %v91
    %v93 = vrot.slane %v50, %v92
    %v94 = vlaneseq
    %v95 = vshrl.u32 %v94, 7
    %v96 = vsub.s32 3, %v95
    %v97 = vrot.slane %v50, %v96
    %vm102 = vcmask 195584
    %v104 = vsel %vm102, %v43, 0
    %vm106 = vcmask 1043456
    %v108 = vsel %vm106, %v73, 0
    %v111 = vsel %vm106, %v74, 0
    %v114 = vsel %vm106, %v75, 0
    %v117 = vsel %vm106, %v76, 0
    %119 = vmatprep.subr.bf16.mxu0 %v70
    %120 = vmatpush1.bf16.msra.mxu0 %v69
    %121 = vmatprep.subr.bf16.mxu0 %v111
    %122 = vmatpush1.bf16.msra.mxu0 %v108
    %123 = vmatprep.subr.bf16.mxu0 0
    %124 = vmatpush1.bf16.msra.mxu0 0
    %125 = vmatprep.subr.bf16.mxu0 0
    %126 = vmatpush1.bf16.msra.mxu0 0
    %127 = vmatprep.subr.bf16.mxu0 0
    %128 = vmatpush1.bf16.msra.mxu0 0
    %129 = vmatprep.subr.bf16.mxu0 0
    %130 = vmatpush1.bf16.msra.mxu0 0
    %131 = vmatprep.subr.bf16.mxu0 0
    %132 = vmatpush1.bf16.msra.mxu0 0
    %133 = vmatprep.subr.bf16.mxu0 0
    %134 = vmatpush1.bf16.msra.mxu0 0
    %135 = vmatprep.subr.bf16.mxu0 0
    %136 = vmatpush1.bf16.msra.mxu0 0
    %137 = vmatprep.subr.bf16.mxu0 0
    %138 = vmatpush1.bf16.msra.mxu0 0
    %139 = vmatprep.subr.bf16.mxu0 0
    %140 = vmatpush1.bf16.msra.mxu0 0
    %141 = vmatprep.subr.bf16.mxu0 0
    %142 = vmatpush1.bf16.msra.mxu0 0
    %143 = vmatprep.subr.bf16.mxu0 0
    %144 = vmatpush1.bf16.msra.mxu0 0
    %145 = vmatprep.subr.bf16.mxu0 0
    %146 = vmatpush1.bf16.msra.mxu0 0
    %147 = vmatprep.subr.bf16.mxu0 0
    %148 = vmatpush1.bf16.msra.mxu0 0
    %149 = vmatprep.subr.bf16.mxu0 0
    %150 = vmatpush1.bf16.msra.mxu0 0
    %151 = vmatprep.mubr.bf16.mxu0 0
    %152 = vmatmul.mubr.bf16.gmra.mrb[0].mxu0 %v104
    %v153 = vpop.f32.mrb[0].mxu0
    %v154 = vadd.f32 %v85, %v153
    %v155 = vpop.f32.mrb[0].mxu0
    %v156 = vadd.f32 %v89, %v155
    %v157 = vpop.f32.mrb[0].mxu0
    %v158 = vpop.f32.mrb[0].mxu0
    %159 = vdwg.mxu0
    %160 = vmatprep.subr.bf16.mxu0 %v72
    %161 = vmatpush1.bf16.msra.mxu0 %v71
    %162 = vmatprep.subr.bf16.mxu0 %v117
    %163 = vmatpush1.bf16.msra.mxu0 %v114
    %164 = vmatprep.subr.bf16.mxu0 0
    %165 = vmatpush1.bf16.msra.mxu0 0
    %166 = vmatprep.subr.bf16.mxu0 0
    %167 = vmatpush1.bf16.msra.mxu0 0
    %168 = vmatprep.subr.bf16.mxu0 0
    %169 = vmatpush1.bf16.msra.mxu0 0
    %170 = vmatprep.subr.bf16.mxu0 0
    %171 = vmatpush1.bf16.msra.mxu0 0
    %172 = vmatprep.subr.bf16.mxu0 0
    %173 = vmatpush1.bf16.msra.mxu0 0
    %174 = vmatprep.subr.bf16.mxu0 0
    %175 = vmatpush1.bf16.msra.mxu0 0
    %176 = vmatprep.subr.bf16.mxu0 0
    %177 = vmatpush1.bf16.msra.mxu0 0
    %178 = vmatprep.subr.bf16.mxu0 0
    %179 = vmatpush1.bf16.msra.mxu0 0
    %180 = vmatprep.subr.bf16.mxu0 0
    %181 = vmatpush1.bf16.msra.mxu0 0
    %182 = vmatprep.subr.bf16.mxu0 0
    %183 = vmatpush1.bf16.msra.mxu0 0
    %184 = vmatprep.subr.bf16.mxu0 0
    %185 = vmatpush1.bf16.msra.mxu0 0
    %186 = vmatprep.subr.bf16.mxu0 0
    %187 = vmatpush1.bf16.msra.mxu0 0
    %188 = vmatprep.subr.bf16.mxu0 0
    %189 = vmatpush1.bf16.msra.mxu0 0
    %190 = vmatprep.subr.bf16.mxu0 0
    %191 = vmatpush1.bf16.msra.mxu0 0
    %192 = vmatprep.mubr.bf16.mxu0 0
    %193 = vmatmul.mubr.bf16.gmra.mrb[0].mxu0 %v104
    %v194 = vpop.f32.mrb[0].mxu0
    %v195 = vadd.f32 %v93, %v194
    %v196 = vpop.f32.mrb[0].mxu0
    %v197 = vadd.f32 %v97, %v196
    %v198 = vpop.f32.mrb[0].mxu0
    %v199 = vpop.f32.mrb[0].mxu0
    %200 = vdwg.mxu0
    %v205 = vcombine.low %v154, %v156
    %v206 = vcombine.low %v195, %v197
    %v208 = vunpack.c.l.s4 1966171168
    %v209 = vunpack.c.0.s8 %v208
    %v210 = vlaneseq
    %v211 = vshrl.u32 %v210, 7
    %v212 = vsub.s32 %v209, %v211
    %v213 = vrot.slane %v205, %v212
    %v215 = vunpack.c.l.s4 1966171168
    %v216 = vunpack.c.0.s8 %v215
    %v217 = vlaneseq
    %v218 = vshrl.u32 %v217, 7
    %v219 = vsub.s32 %v216, %v218
    %v220 = vrot.slane %v206, %v219
    %v221 = vcombine.low %v213, %v220
    %v223 = vunpack.c.l.s4 1966171168
    %v224 = vunpack.c.0.s8 %v223
    %v225 = vlaneseq
    %v226 = vshrl.u32 %v225, 7
    %v227 = vsub.s32 %v224, %v226
    %v228 = vrot.slane %v221, %v227
    %v230 = vlaneseq
    %vm231 = vcmp.ge.s32.totalorder %v230, 0
    %vm232 = vcmp.lt.s32.totalorder %v230, 512
    %vm233 = vmand %vm231, %vm232
    %234 = vst.msk [vmem:[#allocation7] sm:$0xf] %vm233, %v228
    // Predicated region
    $region22: #{tpu_custom_call.1} parent=1 // pred_check
      _
    $region23: #{tpu_custom_call.1} parent=1 // pred_check_branch
      %236 = sbr.rel (0) target = $region25
    $region24: #{tpu_custom_call.1} parent=1 // pred_region
      %s238 = ssub.s32 64, 64
      %239 = vsyncadd [#allocation4], %s238
      %s241 = sshll.u32 [#allocation7], 4
      %s242 = int_to_ptr.vmem [resolvable:$true] %s241
      %244 = dma.vmem_to_hbm [thread:$0]  %s242, 64, %s3, [#allocation4]
    $region25: #{tpu_custom_call.1} parent=1 // pred_fallthru
      _
    // Predicated region
    $region26: #{tpu_custom_call.1} parent=1 // pred_check
      _
    $region27: #{tpu_custom_call.1} parent=1 // pred_check_branch
      %246 = sbr.rel (0) target = $region29
    $region28: #{tpu_custom_call.1} parent=1 // pred_region
      %247 = dma.done [#allocation4], 64
    $region29: #{tpu_custom_call.1} parent=1 // pred_fallthru
      _
    %248 = vsyncpa [#allocation3], 1
    %249 = vsyncpa [#allocation6], 1
    %250 = vsyncpa [#allocation4], 1

</llo_original>
